<compile_context>
chip_gen: v7x
topology: tpu7x:2x2x1
jax: 0.10.0
libtpu: 0.0.40
codegen_flags: <defaults>
</compile_context>

<pallas_src>
import functools
import math

import jax
import jax.numpy as jnp
from jax.experimental import pallas as pl
from jax.experimental.pallas import tpu as pltpu

EPS = 1e-5  # BatchNorm1d default eps


def mymodel_kernel(x_ref, wf_ref, bf_ref, w0_ref, b0_ref, y_ref, probs_ref,
                   *, nb, seq_len):
    """One grid step processes `nb` batch elements laid out as (C, nb*L) with
    the merged batch*length axis on lanes."""
    C = w0_ref.shape[0]

    x = x_ref[...]                                                     # (C, nb*L)

    # Fused (conv+BN)x2 + q/k/v projection: one matmul over the whole slab.
    # TODO(synk): for production C/L, cast x/weights to bf16 (f32 accumulate)
    # to feed the 256-wide MXU on v6e/v7x; kept f32 here for exactness.
    qkv = jnp.dot(wf_ref[...], x, preferred_element_type=jnp.float32) + bf_ref[...]  # (3C, nb*L)

    ctx_cols = []
    for b in range(nb):                                                # static unroll (nb small)
        lo = b * seq_len
        q = qkv[0:C,         lo:lo + seq_len]                          # (C, L)
        k = qkv[C:2 * C,     lo:lo + seq_len]                          # (C, L)
        v = qkv[2 * C:3 * C, lo:lo + seq_len]                          # (C, L)

        # Attention over channels; L (lane axis of q and k) is the contraction
        # axis, so no transpose of k is materialized (stays on the MXU path).
        scores = jax.lax.dot_general(q, k, (((1,), (1,)), ((), ())),
                                     preferred_element_type=jnp.float32)   # (C, C)
        # head_size == 1 -> the 1/sqrt(head_size) scale is identity (dropped).
        scores = scores - jnp.max(scores, axis=-1, keepdims=True)
        e = jnp.exp(scores)
        probs = e * pl.reciprocal(jnp.sum(e, axis=-1, keepdims=True), approx=False)
        # TODO(synk): Dropout(p=0.2) on attention_probs is identity in eval mode.
        probs_ref[b] = probs.astype(probs_ref.dtype)

        # context[i, l] = sum_j probs[i, j] * V[j, l]
        ctx_cols.append(jnp.dot(probs, v, preferred_element_type=jnp.float32))   # (C, L)

    ctx = ctx_cols[0] if nb == 1 else jnp.concatenate(ctx_cols, axis=1)  # (C, nb*L)

    # conv0: Conv1d(C->C, k=1, pad=0) over the full lane-merged slab.
    y = jnp.dot(w0_ref[...], ctx, preferred_element_type=jnp.float32) + b0_ref[...]  # (C, nb*L)
    y_ref[...] = y.astype(y_ref.dtype)


def init_params(key, C):
    """Deterministic parameter init matching the PyTorch module's shapes."""
    ks = jax.random.split(key, 16)
    scale = 0.3
    p = {}
    # conv[0]: Conv1d(C, 2C, k=1) -> weight (2C, C), bias (2C,)
    p["w1"] = scale * jax.random.normal(ks[0], (2 * C, C), jnp.float32)
    p["b1"] = scale * jax.random.normal(ks[1], (2 * C,), jnp.float32)
    # conv[1]: BatchNorm1d(2C)
    p["g1"] = 1.0 + 0.1 * jax.random.normal(ks[2], (2 * C,), jnp.float32)
    p["be1"] = 0.1 * jax.random.normal(ks[3], (2 * C,), jnp.float32)
    p["rm1"] = 0.1 * jax.random.normal(ks[4], (2 * C,), jnp.float32)
    p["rv1"] = 0.5 + jax.random.uniform(ks[5], (2 * C,), jnp.float32)
    # conv[2]: Conv1d(2C, C, k=1) -> weight (C, 2C), bias (C,)
    p["w2"] = scale * jax.random.normal(ks[6], (C, 2 * C), jnp.float32)
    p["b2"] = scale * jax.random.normal(ks[7], (C,), jnp.float32)
    # conv[3]: BatchNorm1d(C)
    p["g2"] = 1.0 + 0.1 * jax.random.normal(ks[8], (C,), jnp.float32)
    p["be2"] = 0.1 * jax.random.normal(ks[9], (C,), jnp.float32)
    p["rm2"] = 0.1 * jax.random.normal(ks[10], (C,), jnp.float32)
    p["rv2"] = 0.5 + jax.random.uniform(ks[11], (C,), jnp.float32)
    # attention linear layers: Linear(C, C)
    p["wq"] = scale * jax.random.normal(ks[12], (C, C), jnp.float32)
    p["bq"] = scale * jax.random.normal(ks[13], (C,), jnp.float32)
    p["wk"] = scale * jax.random.normal(ks[14], (C, C), jnp.float32)
    p["bk"] = scale * jax.random.normal(ks[15], (C,), jnp.float32)
    k2 = jax.random.split(jax.random.fold_in(key, 1), 4)
    p["wv"] = scale * jax.random.normal(k2[0], (C, C), jnp.float32)
    p["bv"] = scale * jax.random.normal(k2[1], (C,), jnp.float32)
    # conv0: Conv1d(C, C, k=1)
    p["w0"] = scale * jax.random.normal(k2[2], (C, C), jnp.float32)
    p["b0"] = scale * jax.random.normal(k2[3], (C,), jnp.float32)
    return p


def fold_params(p):
    """Fold eval-mode BNs into the convs, then fold the whole pre-attention
    linear chain into the q/k/v projection:
        W_fused = Wqkv @ W2' @ W1'     (3C, C)
        b_fused = Wqkv @ (W2' b1' + b2') + bqkv   (3C, 1)
    """
    s1 = p["g1"] * jax.lax.rsqrt(p["rv1"] + EPS)                       # (2C,)
    w1p = p["w1"] * s1[:, None]                                        # (2C, C)
    b1p = (p["b1"] - p["rm1"]) * s1 + p["be1"]                         # (2C,)

    s2 = p["g2"] * jax.lax.rsqrt(p["rv2"] + EPS)                       # (C,)
    w2p = p["w2"] * s2[:, None]                                        # (C, 2C)
    b2p = (p["b2"] - p["rm2"]) * s2 + p["be2"]                         # (C,)

    w_chain = w2p @ w1p                                                # (C, C)
    b_chain = w2p @ b1p + b2p                                          # (C,)

    wqkv = jnp.concatenate([p["wq"], p["wk"], p["wv"]], axis=0)        # (3C, C)
    bqkv = jnp.concatenate([p["bq"], p["bk"], p["bv"]], axis=0)        # (3C,)

    w_fused = wqkv @ w_chain                                           # (3C, C)
    b_fused = (wqkv @ b_chain + bqkv)[:, None]                         # (3C, 1)

    return w_fused, b_fused, p["w0"], p["b0"][:, None]


def mymodel_forward(x_ncl, params, batch_per_step=None):
    """x_ncl: (B, C, L) float32  ->  (y: (B, C, L), probs: (B, 1, C, C))"""
    B, C, L = x_ncl.shape
    if batch_per_step is None:
        # At the tested sizes the whole batch fits trivially in VMEM; one grid
        # step amortizes the ~0.35us/step overhead.  For production B one would
        # tile here (parallel grid axis -> both v7x TensorCores) and keep
        # nb*L a multiple of 128.
        batch_per_step = B
    nb = batch_per_step
    assert B % nb == 0
    nsteps = B // nb

    w_fused, b_fused, w0, b0 = fold_params(params)

    # Merge batch into the lane axis: (B, C, L) -> (C, B*L).
    x_cbl = jnp.transpose(x_ncl, (1, 0, 2)).reshape(C, B * L)

    kernel = functools.partial(mymodel_kernel, nb=nb, seq_len=L)

    def wspec(arr):
        # Grid-invariant weight: full block, always block (0, ..., 0).
        # (For large grids one could add pipeline_mode=pl.Buffered(1) /
        #  one-shot DMA to scratch; irrelevant for a size-1 grid.)
        nd = arr.ndim
        return pl.BlockSpec(arr.shape, lambda i, _n=nd: (0,) * _n)

    y_cbl, probs = pl.pallas_call(
        kernel,
        out_shape=(
            jax.ShapeDtypeStruct((C, B * L), jnp.float32),
            jax.ShapeDtypeStruct((B, C, C), jnp.float32),
        ),
        grid=(nsteps,),
        in_specs=[
            pl.BlockSpec((C, nb * L), lambda i: (0, i)),       # x slab
            wspec(w_fused), wspec(b_fused), wspec(w0), wspec(b0),
        ],
        out_specs=(
            pl.BlockSpec((C, nb * L), lambda i: (0, i)),       # y slab (lane-merged)
            pl.BlockSpec((nb, C, C), lambda i: (i, 0, 0)),     # per-batch probs
        ),
        compiler_params=pltpu.CompilerParams(
            dimension_semantics=("parallel",)),
    )(x_cbl, w_fused, b_fused, w0, b0)

    y_ncl = jnp.transpose(y_cbl.reshape(C, B, L), (1, 0, 2))           # (B, C, L)
    probs4 = probs.reshape(B, 1, C, C)                                 # (B, head_size=1, H, H)
    return y_ncl, probs4


def mymodel_reference(x_ncl, p):
    """Pure-JAX reference of the same (eval-mode) forward pass, un-fused."""
    h = jnp.einsum("oc,bcl->bol", p["w1"], x_ncl) + p["b1"][None, :, None]
    h = ((h - p["rm1"][None, :, None]) / jnp.sqrt(p["rv1"][None, :, None] + EPS)
         * p["g1"][None, :, None] + p["be1"][None, :, None])
    h = jnp.einsum("oc,bcl->bol", p["w2"], h) + p["b2"][None, :, None]
    h = ((h - p["rm2"][None, :, None]) / jnp.sqrt(p["rv2"][None, :, None] + EPS)
         * p["g2"][None, :, None] + p["be2"][None, :, None])
    hlc = jnp.transpose(h, (0, 2, 1))                                  # (B, L, C)
    q = hlc @ p["wq"].T + p["bq"]
    k = hlc @ p["wk"].T + p["bk"]
    v = hlc @ p["wv"].T + p["bv"]
    scores = jnp.einsum("bli,blj->bij", q, k) / math.sqrt(1.0)
    probs = jax.nn.softmax(scores, axis=-1)
    ctx = jnp.einsum("bij,blj->bli", probs, v)                         # (B, L, C)
    ctx_cl = jnp.transpose(ctx, (0, 2, 1))                             # (B, C, L)
    y = jnp.einsum("oc,bcl->bol", p["w0"], ctx_cl) + p["b0"][None, :, None]
    return y, probs[:, None, :, :]


if __name__ == "__main__":
    B, C, L = 2, 4, 16          # input_channel = 4, sequence length = 16
    key = jax.random.PRNGKey(0)
    kx, kp = jax.random.split(key)
    x = jax.random.normal(kx, (B, C, L), jnp.float32)
    params = init_params(kp, C)

    y, probs = mymodel_forward(x, params)
    y = jax.block_until_ready(y)
    probs = jax.block_until_ready(probs)

    y_ref, probs_ref = mymodel_reference(x, params)
    assert y.shape == (B, C, L) and probs.shape == (B, 1, C, C)
    assert jnp.allclose(y, y_ref, atol=1e-4, rtol=1e-4)
    assert jnp.allclose(probs, probs_ref, atol=1e-5, rtol=1e-4)

    print("KERNEL_OK")
</pallas_src>

<mosaic_0001>
module attributes {stable_mosaic.version = 11 : i64} {
  func.func @mymodel_kernel(%arg0: i32, %arg1: memref<4x32xf32, #tpu.memory_space<vmem>>, %arg2: memref<12x4xf32, #tpu.memory_space<vmem>>, %arg3: memref<12x1xf32, #tpu.memory_space<vmem>>, %arg4: memref<4x4xf32, #tpu.memory_space<vmem>>, %arg5: memref<4x1xf32, #tpu.memory_space<vmem>>, %arg6: memref<4x32xf32, #tpu.memory_space<vmem>>, %arg7: memref<2x4x4xf32, #tpu.memory_space<vmem>>) attributes {dimension_semantics = [#tpu.dimension_semantics<parallel>], iteration_bounds = array<i64: 1>, scalar_prefetch = 0 : i64, scratch_operands = 0 : i64, tpu.core_type = #tpu.core_type<tc>, window_params = [{transform_indices = @transform_0, window_bounds = array<i64: 4, 32>}, {pipeline_mode = #tpu.pipeline_mode<synchronous>, transform_indices = @transform_1, window_bounds = array<i64: 12, 4>}, {pipeline_mode = #tpu.pipeline_mode<synchronous>, transform_indices = @transform_2, window_bounds = array<i64: 12, 1>}, {pipeline_mode = #tpu.pipeline_mode<synchronous>, transform_indices = @transform_3, window_bounds = array<i64: 4, 4>}, {pipeline_mode = #tpu.pipeline_mode<synchronous>, transform_indices = @transform_4, window_bounds = array<i64: 4, 1>}, {transform_indices = @transform_5, window_bounds = array<i64: 4, 32>}, {transform_indices = @transform_6, window_bounds = array<i64: 2, 4, 4>}]} {
    %c0 = arith.constant 0 : index
    %c0_0 = arith.constant 0 : index
    %0 = vector.load %arg1[%c0, %c0_0] : memref<4x32xf32, #tpu.memory_space<vmem>>, vector<4x32xf32>
    %c0_1 = arith.constant 0 : index
    %c0_2 = arith.constant 0 : index
    %1 = vector.load %arg2[%c0_1, %c0_2] : memref<12x4xf32, #tpu.memory_space<vmem>>, vector<12x4xf32>
    %cst = arith.constant dense<0.000000e+00> : vector<12x32xf32>
    %2 = tpu.matmul %1, %0, %cst {dimension_numbers = #tpu.dot_dimension_numbers<[1], [0], [0], [1], [0, 0, 1, 1], [], []>} : vector<12x4xf32>, vector<4x32xf32>, vector<12x32xf32> -> vector<12x32xf32>
    %c0_3 = arith.constant 0 : index
    %c0_4 = arith.constant 0 : index
    %3 = vector.load %arg3[%c0_3, %c0_4] : memref<12x1xf32, #tpu.memory_space<vmem>>, vector<12x1xf32>
    %4 = vector.broadcast %3 : vector<12x1xf32> to vector<12x32xf32>
    %5 = arith.addf %2, %4 : vector<12x32xf32>
    %6 = vector.extract_strided_slice %5 {offsets = [0, 0], sizes = [4, 16], strides = [1, 1]} : vector<12x32xf32> to vector<4x16xf32>
    %7 = vector.extract_strided_slice %5 {offsets = [4, 0], sizes = [4, 16], strides = [1, 1]} : vector<12x32xf32> to vector<4x16xf32>
    %8 = vector.extract_strided_slice %5 {offsets = [8, 0], sizes = [4, 16], strides = [1, 1]} : vector<12x32xf32> to vector<4x16xf32>
    %cst_5 = arith.constant dense<0.000000e+00> : vector<4x4xf32>
    %9 = tpu.matmul %6, %7, %cst_5 {dimension_numbers = #tpu.dot_dimension_numbers<[1], [1], [0], [0], [0, 0, 1, 0], [], []>} : vector<4x16xf32>, vector<4x16xf32>, vector<4x4xf32> -> vector<4x4xf32>
    %cst_6 = arith.constant dense<0xFF800000> : vector<4xf32>
    %10 = vector.multi_reduction <maximumf>, %9, %cst_6 [1] : vector<4x4xf32> to vector<4xf32>
    %11 = vector.shape_cast %10 : vector<4xf32> to vector<4x1xf32>
    %12 = vector.broadcast %11 : vector<4x1xf32> to vector<4x4xf32>
    %13 = arith.subf %9, %12 : vector<4x4xf32>
    %14 = math.exp %13 : vector<4x4xf32>
    %cst_7 = arith.constant dense<0.000000e+00> : vector<4xf32>
    %15 = vector.multi_reduction <add>, %14, %cst_7 [1] : vector<4x4xf32> to vector<4xf32>
    %16 = vector.shape_cast %15 : vector<4xf32> to vector<4x1xf32>
    %17 = tpu.reciprocal %16 : vector<4x1xf32> -> vector<4x1xf32>
    %18 = vector.broadcast %17 : vector<4x1xf32> to vector<4x4xf32>
    %19 = arith.mulf %14, %18 : vector<4x4xf32>
    %c0_8 = arith.constant 0 : index
    %c0_9 = arith.constant 0 : index
    %c0_10 = arith.constant 0 : index
    %20 = vector.load %arg7[%c0_8, %c0_9, %c0_10] : memref<2x4x4xf32, #tpu.memory_space<vmem>>, vector<1x4x4xf32>
    %21 = vector.shape_cast %20 : vector<1x4x4xf32> to vector<4x4xf32>
    %22 = vector.shape_cast %19 : vector<4x4xf32> to vector<1x4x4xf32>
    tpu.vector_store %arg7[%c0_8, %c0_9, %c0_10], %22 {strides = array<i32>} : memref<2x4x4xf32, #tpu.memory_space<vmem>>, vector<1x4x4xf32>,
    %cst_11 = arith.constant dense<0.000000e+00> : vector<4x16xf32>
    %23 = tpu.matmul %19, %8, %cst_11 {dimension_numbers = #tpu.dot_dimension_numbers<[1], [0], [0], [1], [0, 0, 1, 1], [], []>} : vector<4x4xf32>, vector<4x16xf32>, vector<4x16xf32> -> vector<4x16xf32>
    %24 = vector.extract_strided_slice %5 {offsets = [0, 16], sizes = [4, 16], strides = [1, 1]} : vector<12x32xf32> to vector<4x16xf32>
    %25 = vector.extract_strided_slice %5 {offsets = [4, 16], sizes = [4, 16], strides = [1, 1]} : vector<12x32xf32> to vector<4x16xf32>
    %26 = vector.extract_strided_slice %5 {offsets = [8, 16], sizes = [4, 16], strides = [1, 1]} : vector<12x32xf32> to vector<4x16xf32>
    %cst_12 = arith.constant dense<0.000000e+00> : vector<4x4xf32>
    %27 = tpu.matmul %24, %25, %cst_12 {dimension_numbers = #tpu.dot_dimension_numbers<[1], [1], [0], [0], [0, 0, 1, 0], [], []>} : vector<4x16xf32>, vector<4x16xf32>, vector<4x4xf32> -> vector<4x4xf32>
    %cst_13 = arith.constant dense<0xFF800000> : vector<4xf32>
    %28 = vector.multi_reduction <maximumf>, %27, %cst_13 [1] : vector<4x4xf32> to vector<4xf32>
    %29 = vector.shape_cast %28 : vector<4xf32> to vector<4x1xf32>
    %30 = vector.broadcast %29 : vector<4x1xf32> to vector<4x4xf32>
    %31 = arith.subf %27, %30 : vector<4x4xf32>
    %32 = math.exp %31 : vector<4x4xf32>
    %cst_14 = arith.constant dense<0.000000e+00> : vector<4xf32>
    %33 = vector.multi_reduction <add>, %32, %cst_14 [1] : vector<4x4xf32> to vector<4xf32>
    %34 = vector.shape_cast %33 : vector<4xf32> to vector<4x1xf32>
    %35 = tpu.reciprocal %34 : vector<4x1xf32> -> vector<4x1xf32>
    %36 = vector.broadcast %35 : vector<4x1xf32> to vector<4x4xf32>
    %37 = arith.mulf %32, %36 : vector<4x4xf32>
    %c1 = arith.constant 1 : index
    %c0_15 = arith.constant 0 : index
    %c0_16 = arith.constant 0 : index
    %38 = vector.load %arg7[%c1, %c0_15, %c0_16] : memref<2x4x4xf32, #tpu.memory_space<vmem>>, vector<1x4x4xf32>
    %39 = vector.shape_cast %38 : vector<1x4x4xf32> to vector<4x4xf32>
    %40 = vector.shape_cast %37 : vector<4x4xf32> to vector<1x4x4xf32>
    tpu.vector_store %arg7[%c1, %c0_15, %c0_16], %40 {strides = array<i32>} : memref<2x4x4xf32, #tpu.memory_space<vmem>>, vector<1x4x4xf32>,
    %cst_17 = arith.constant dense<0.000000e+00> : vector<4x16xf32>
    %41 = tpu.matmul %37, %26, %cst_17 {dimension_numbers = #tpu.dot_dimension_numbers<[1], [0], [0], [1], [0, 0, 1, 1], [], []>} : vector<4x4xf32>, vector<4x16xf32>, vector<4x16xf32> -> vector<4x16xf32>
    %42 = tpu.concatenate %23, %41 in 1 : vector<4x16xf32>, vector<4x16xf32> -> vector<4x32xf32>
    %c0_18 = arith.constant 0 : index
    %c0_19 = arith.constant 0 : index
    %43 = vector.load %arg4[%c0_18, %c0_19] : memref<4x4xf32, #tpu.memory_space<vmem>>, vector<4x4xf32>
    %cst_20 = arith.constant dense<0.000000e+00> : vector<4x32xf32>
    %44 = tpu.matmul %43, %42, %cst_20 {dimension_numbers = #tpu.dot_dimension_numbers<[1], [0], [0], [1], [0, 0, 1, 1], [], []>} : vector<4x4xf32>, vector<4x32xf32>, vector<4x32xf32> -> vector<4x32xf32>
    %c0_21 = arith.constant 0 : index
    %c0_22 = arith.constant 0 : index
    %45 = vector.load %arg5[%c0_21, %c0_22] : memref<4x1xf32, #tpu.memory_space<vmem>>, vector<4x1xf32>
    %46 = vector.broadcast %45 : vector<4x1xf32> to vector<4x32xf32>
    %47 = arith.addf %44, %46 : vector<4x32xf32>
    %c0_23 = arith.constant 0 : index
    %c0_24 = arith.constant 0 : index
    %48 = vector.load %arg6[%c0_23, %c0_24] : memref<4x32xf32, #tpu.memory_space<vmem>>, vector<4x32xf32>
    tpu.vector_store %arg6[%c0_23, %c0_24], %47 {strides = array<i32>} : memref<4x32xf32, #tpu.memory_space<vmem>>, vector<4x32xf32>,
    return
  }
  func.func @transform_0(%arg0: i32) -> (i32, i32) {
    %c0_i32 = arith.constant 0 : i32
    %c0_i32_0 = arith.constant 0 : i32
    return %c0_i32, %arg0 : i32, i32
  }
  func.func @transform_1(%arg0: i32) -> (i32, i32) {
    %c0_i32 = arith.constant 0 : i32
    %c0_i32_0 = arith.constant 0 : i32
    %c0_i32_1 = arith.constant 0 : i32
    return %c0_i32, %c0_i32_0 : i32, i32
  }
  func.func @transform_2(%arg0: i32) -> (i32, i32) {
    %c0_i32 = arith.constant 0 : i32
    %c0_i32_0 = arith.constant 0 : i32
    %c0_i32_1 = arith.constant 0 : i32
    return %c0_i32, %c0_i32_0 : i32, i32
  }
  func.func @transform_3(%arg0: i32) -> (i32, i32) {
    %c0_i32 = arith.constant 0 : i32
    %c0_i32_0 = arith.constant 0 : i32
    %c0_i32_1 = arith.constant 0 : i32
    return %c0_i32, %c0_i32_0 : i32, i32
  }
  func.func @transform_4(%arg0: i32) -> (i32, i32) {
    %c0_i32 = arith.constant 0 : i32
    %c0_i32_0 = arith.constant 0 : i32
    %c0_i32_1 = arith.constant 0 : i32
    return %c0_i32, %c0_i32_0 : i32, i32
  }
  func.func @transform_5(%arg0: i32) -> (i32, i32) {
    %c0_i32 = arith.constant 0 : i32
    %c0_i32_0 = arith.constant 0 : i32
    return %c0_i32, %arg0 : i32, i32
  }
  func.func @transform_6(%arg0: i32) -> (i32, i32, i32) {
    %c0_i32 = arith.constant 0 : i32
    %c0_i32_0 = arith.constant 0 : i32
    %c0_i32_1 = arith.constant 0 : i32
    return %arg0, %c0_i32, %c0_i32_0 : i32, i32, i32
  }
}

</mosaic_0001>

<llo_original>
// kernel: tpu_custom_call.1
$region0: #{tpu_custom_call.1}
  #allocation0 [shape = 'u32[]', space=smem, size = 0x4, offset = 0x4, fixed_abs, tag = 'smem constant byte address 0x4 - core index']
  #allocation1 [shape = 'u32[144,128]{1,0:T(1,128)}', space=vmem, size = 0x12000, scoped, tag = 'internal scratch']
  %s0 = inlined_call_operand.vmem [shape: f32[4,32], index: 0, kind: input, shape index: {}]
  %s1 = inlined_call_operand.vmem [shape: f32[12,4], index: 1, kind: input, shape index: {}]
  %s2 = inlined_call_operand.vmem [shape: f32[12,1], index: 2, kind: input, shape index: {}]
  %s3 = inlined_call_operand.vmem [shape: f32[4,4], index: 3, kind: input, shape index: {}]
  %s4 = inlined_call_operand.vmem [shape: f32[4,1], index: 4, kind: input, shape index: {}]
  %s5 = inlined_call_operand.hbm [shape: f32[4,32], index: 5, kind: output, shape index: {0}]
  %s6 = inlined_call_operand.hbm [shape: f32[2,4,4], index: 6, kind: output, shape index: {1}]
  %7 = xla_tuple %s5, %s6
  %s8 = sld [smem:[#allocation0]]
  $region38: #{tpu_custom_call.1} parent=0
    _
  %s10 = ssub.s32 1, %s8
  %s11 = scalar_select 0, %s10, %s8
  $region1: #{tpu_custom_call.1} parent=0
    #allocation2 [shape = 'u8[2048]{0}', space=vmem, size = 0x800, scoped, tag = 'output window, operand 0, single buffered']
    #allocation3 [shape = 's32[1]{0}', space=sflag, size = 0x4, scoped, tag = 'scoped memory for tpu_custom_call.1']
    #allocation4 [shape = 'u8[4096]{0}', space=vmem, size = 0x1000, scoped, tag = 'output window, operand 1, single buffered']
    #allocation5 [shape = 's32[1]{0}', space=sflag, size = 0x4, scoped, tag = 'scoped memory for tpu_custom_call.1']
    %12 = vsyncpa [#allocation3], 0
    %13 = vsyncpa [#allocation5], 0
    // Predicated region
    $region2: #{tpu_custom_call.1} parent=1 // pred_check
      _
    $region3: #{tpu_custom_call.1} parent=1 // pred_check_branch
      %15 = sbr.rel (0) target = $region5
    $region4: #{tpu_custom_call.1} parent=1 // pred_region
      _
    $region5: #{tpu_custom_call.1} parent=1 // pred_fallthru
      _
    // Predicated region
    $region6: #{tpu_custom_call.1} parent=1 // pred_check
      _
    $region7: #{tpu_custom_call.1} parent=1 // pred_check_branch
      %17 = sbr.rel (0) target = $region9
    $region8: #{tpu_custom_call.1} parent=1 // pred_region
      _
    $region9: #{tpu_custom_call.1} parent=1 // pred_fallthru
      _
    // Predicated region
    $region10: #{tpu_custom_call.1} parent=1 // pred_check
      _
    $region11: #{tpu_custom_call.1} parent=1 // pred_check_branch
      %19 = sbr.rel (0) target = $region13
    $region12: #{tpu_custom_call.1} parent=1 // pred_region
      _
    $region13: #{tpu_custom_call.1} parent=1 // pred_fallthru
      _
    // Predicated region
    $region14: #{tpu_custom_call.1} parent=1 // pred_check
      _
    $region15: #{tpu_custom_call.1} parent=1 // pred_check_branch
      %21 = sbr.rel (0) target = $region17
    $region16: #{tpu_custom_call.1} parent=1 // pred_region
      _
    $region17: #{tpu_custom_call.1} parent=1 // pred_fallthru
      _
    // Predicated region
    $region18: #{tpu_custom_call.1} parent=1 // pred_check
      _
    $region19: #{tpu_custom_call.1} parent=1 // pred_check_branch
      %23 = sbr.rel (0) target = $region21
    $region20: #{tpu_custom_call.1} parent=1 // pred_region
      _
    $region21: #{tpu_custom_call.1} parent=1 // pred_fallthru
      _
    %v24 = vld [vmem:[%s0] sm:$0xf]
    %v25 = vld [vmem:[%s1] sm:$0xff]
    %v26 = vld [vmem:[%s1 + $0x8] sm:$0xf]
    %v27 = vld [vmem:[%s2] sm:$0xff]
    %v28 = vld [vmem:[%s2 + $0x8] sm:$0xf]
    %30 = vset.pattern.permute.xlu0 0
    %31 = vperm.xlu0 %30, %v27
    %v32 = vpop.permute.xlu0 %31
    %35 = vset.pattern.permute.xlu0 0
    %36 = vperm.xlu0 %35, %v28
    %v37 = vpop.permute.xlu0 %36
    %vm39 = vcmask 31744
    %v41 = vsel %vm39, %v25, 0
    %v44 = vsel %vm39, %v26, 0
    %vm46 = vcmask 1043456
    %v48 = vsel %vm46, %v24, 0
    %50 = vmatprep.subr.mxu0 0.0
    %51 = vmatpush1.msra.mxu0 %v48
    %52 = vmatprep.subr.mxu0 0.0
    %53 = vmatpush1.msra.mxu0 0.0
    %54 = vmatprep.subr.mxu0 0.0
    %55 = vmatpush1.msra.mxu0 0.0
    %56 = vmatprep.subr.mxu0 0.0
    %57 = vmatpush1.msra.mxu0 0.0
    %58 = vmatprep.subr.mxu0 0.0
    %59 = vmatpush1.msra.mxu0 0.0
    %60 = vmatprep.subr.mxu0 0.0
    %61 = vmatpush1.msra.mxu0 0.0
    %62 = vmatprep.subr.mxu0 0.0
    %63 = vmatpush1.msra.mxu0 0.0
    %64 = vmatprep.subr.mxu0 0.0
    %65 = vmatpush1.msra.mxu0 0.0
    %66 = vmatprep.subr.mxu0 0.0
    %67 = vmatpush1.msra.mxu0 0.0
    %68 = vmatprep.subr.mxu0 0.0
    %69 = vmatpush1.msra.mxu0 0.0
    %70 = vmatprep.subr.mxu0 0.0
    %71 = vmatpush1.msra.mxu0 0.0
    %72 = vmatprep.subr.mxu0 0.0
    %73 = vmatpush1.msra.mxu0 0.0
    %74 = vmatprep.subr.mxu0 0.0
    %75 = vmatpush1.msra.mxu0 0.0
    %76 = vmatprep.subr.mxu0 0.0
    %77 = vmatpush1.msra.mxu0 0.0
    %78 = vmatprep.subr.mxu0 0.0
    %79 = vmatpush1.msra.mxu0 0.0
    %80 = vmatprep.subr.mxu0 0.0
    %81 = vmatpush1.msra.mxu0 0.0
    %82 = vmatprep.subr.mxu0 0.0
    %83 = vmatpush1.msra.mxu0 0.0
    %84 = vmatprep.subr.mxu0 0.0
    %85 = vmatpush1.msra.mxu0 0.0
    %86 = vmatprep.subr.mxu0 0.0
    %87 = vmatpush1.msra.mxu0 0.0
    %88 = vmatprep.subr.mxu0 0.0
    %89 = vmatpush1.msra.mxu0 0.0
    %90 = vmatprep.subr.mxu0 0.0
    %91 = vmatpush1.msra.mxu0 0.0
    %92 = vmatprep.subr.mxu0 0.0
    %93 = vmatpush1.msra.mxu0 0.0
    %94 = vmatprep.subr.mxu0 0.0
    %95 = vmatpush1.msra.mxu0 0.0
    %96 = vmatprep.subr.mxu0 0.0
    %97 = vmatpush1.msra.mxu0 0.0
    %98 = vmatprep.subr.mxu0 0.0
    %99 = vmatpush1.msra.mxu0 0.0
    %100 = vmatprep.subr.mxu0 0.0
    %101 = vmatpush1.msra.mxu0 0.0
    %102 = vmatprep.subr.mxu0 0.0
    %103 = vmatpush1.msra.mxu0 0.0
    %104 = vmatprep.subr.mxu0 0.0
    %105 = vmatpush1.msra.mxu0 0.0
    %106 = vmatprep.subr.mxu0 0.0
    %107 = vmatpush1.msra.mxu0 0.0
    %108 = vmatprep.subr.mxu0 0.0
    %109 = vmatpush1.msra.mxu0 0.0
    %110 = vmatprep.subr.mxu0 0.0
    %111 = vmatpush1.msra.mxu0 0.0
    %112 = vmatprep.subr.mxu0 0.0
    %113 = vmatpush1.msra.mxu0 0.0
    %114 = vmatprep.mubr.f32.mxu0 0.0
    %115 = vmatmul.mubr.f32.gmra.mrb[0].mxu0 %v41
    %v116 = vpop.f32.mrb[0].mxu0
    %v117 = vadd.f32 %v32, %v116
    %v118 = vpop.f32.mrb[0].mxu0
    %119 = vmatprep.mubr.f32.mxu0 0.0
    %120 = vmatmul.mubr.f32.gmra.mrb[0].mxu0 %v44
    %v121 = vpop.f32.mrb[0].mxu0
    %v122 = vadd.f32 %v37, %v121
    %v123 = vpop.f32.mrb[0].mxu0
    %124 = vdwg.mxu0
    %v126 = vrot.slane %v117, 4
    %vm127 = vcmask 130048
    %v128 = vsel %vm127, %v117, 0
    %v130 = vsel %vm127, %v126, 0
    %132 = vmatprep.subr.mxu0 0.0
    %133 = vmatpush1.xpose.msra.mxu0 %v130
    %134 = vmatprep.subr.mxu0 0.0
    %135 = vmatpush1.xpose.msra.mxu0 0.0
    %136 = vmatprep.subr.mxu0 0.0
    %137 = vmatpush1.xpose.msra.mxu0 0.0
    %138 = vmatprep.subr.mxu0 0.0
    %139 = vmatpush1.xpose.msra.mxu0 0.0
    %140 = vmatprep.subr.mxu0 0.0
    %141 = vmatpush1.xpose.msra.mxu0 0.0
    %142 = vmatprep.subr.mxu0 0.0
    %143 = vmatpush1.xpose.msra.mxu0 0.0
    %144 = vmatprep.subr.mxu0 0.0
    %145 = vmatpush1.xpose.msra.mxu0 0.0
    %146 = vmatprep.subr.mxu0 0.0
    %147 = vmatpush1.xpose.msra.mxu0 0.0
    %148 = vmatprep.subr.mxu0 0.0
    %149 = vmatpush1.xpose.msra.mxu0 0.0
    %150 = vmatprep.subr.mxu0 0.0
    %151 = vmatpush1.xpose.msra.mxu0 0.0
    %152 = vmatprep.subr.mxu0 0.0
    %153 = vmatpush1.xpose.msra.mxu0 0.0
    %154 = vmatprep.subr.mxu0 0.0
    %155 = vmatpush1.xpose.msra.mxu0 0.0
    %156 = vmatprep.subr.mxu0 0.0
    %157 = vmatpush1.xpose.msra.mxu0 0.0
    %158 = vmatprep.subr.mxu0 0.0
    %159 = vmatpush1.xpose.msra.mxu0 0.0
    %160 = vmatprep.subr.mxu0 0.0
    %161 = vmatpush1.xpose.msra.mxu0 0.0
    %162 = vmatprep.subr.mxu0 0.0
    %163 = vmatpush1.xpose.msra.mxu0 0.0
    %164 = vmatprep.subr.mxu0 0.0
    %165 = vmatpush1.xpose.msra.mxu0 0.0
    %166 = vmatprep.subr.mxu0 0.0
    %167 = vmatpush1.xpose.msra.mxu0 0.0
    %168 = vmatprep.subr.mxu0 0.0
    %169 = vmatpush1.xpose.msra.mxu0 0.0
    %170 = vmatprep.subr.mxu0 0.0
    %171 = vmatpush1.xpose.msra.mxu0 0.0
    %172 = vmatprep.subr.mxu0 0.0
    %173 = vmatpush1.xpose.msra.mxu0 0.0
    %174 = vmatprep.subr.mxu0 0.0
    %175 = vmatpush1.xpose.msra.mxu0 0.0
    %176 = vmatprep.subr.mxu0 0.0
    %177 = vmatpush1.xpose.msra.mxu0 0.0
    %178 = vmatprep.subr.mxu0 0.0
    %179 = vmatpush1.xpose.msra.mxu0 0.0
    %180 = vmatprep.subr.mxu0 0.0
    %181 = vmatpush1.xpose.msra.mxu0 0.0
    %182 = vmatprep.subr.mxu0 0.0
    %183 = vmatpush1.xpose.msra.mxu0 0.0
    %184 = vmatprep.subr.mxu0 0.0
    %185 = vmatpush1.xpose.msra.mxu0 0.0
    %186 = vmatprep.subr.mxu0 0.0
    %187 = vmatpush1.xpose.msra.mxu0 0.0
    %188 = vmatprep.subr.mxu0 0.0
    %189 = vmatpush1.xpose.msra.mxu0 0.0
    %190 = vmatprep.subr.mxu0 0.0
    %191 = vmatpush1.xpose.msra.mxu0 0.0
    %192 = vmatprep.subr.mxu0 0.0
    %193 = vmatpush1.xpose.msra.mxu0 0.0
    %194 = vmatprep.subr.mxu0 0.0
    %195 = vmatpush1.xpose.msra.mxu0 0.0
    %196 = vmatprep.mubr.f32.mxu0 0.0
    %197 = vmatmul.mubr.f32.gmra.mrb[0].mxu0 %v128
    %v198 = vpop.f32.mrb[0].mxu0
    %v199 = vadd.f32 0.0, %v198
    %v200 = vpop.f32.mrb[0].mxu0
    %201 = vdwg.mxu0
    %vm202 = vcmask 27648
    %v203 = vsel %vm202, %v199, -inf
    %204 = vmax.xlane.f32.xlu0 %v203
    %v205 = vpop.xlane.xlu0 %204
    %v206 = vsub.f32 %v199, %v205
    %v207 = vmul.f32 %v206, 1.442695
    %v208 = vpow.pop %v207
    %v209 = vsel %vm202, %v208, 0.0
    %210 = vadd.xlane.f32.xlu0 %v209
    %v211 = vpop.xlane.xlu0 %210
    %v212 = vrcp.pop %v211
    %v213 = vmul.f32 %v208, %v212
    %214 = vst.msk [vmem:[#allocation4] sm:$0xf] %vm202, %v213
    %v216 = vsel %vm39, %v213, 0
    %v219 = vsel %vm46, %v122, 0
    %221 = vmatprep.subr.mxu0 0.0
    %222 = vmatpush1.msra.mxu0 %v219
    %223 = vmatprep.subr.mxu0 0.0
    %224 = vmatpush1.msra.mxu0 0.0
    %225 = vmatprep.subr.mxu0 0.0
    %226 = vmatpush1.msra.mxu0 0.0
    %227 = vmatprep.subr.mxu0 0.0
    %228 = vmatpush1.msra.mxu0 0.0
    %229 = vmatprep.subr.mxu0 0.0
    %230 = vmatpush1.msra.mxu0 0.0
    %231 = vmatprep.subr.mxu0 0.0
    %232 = vmatpush1.msra.mxu0 0.0
    %233 = vmatprep.subr.mxu0 0.0
    %234 = vmatpush1.msra.mxu0 0.0
    %235 = vmatprep.subr.mxu0 0.0
    %236 = vmatpush1.msra.mxu0 0.0
    %237 = vmatprep.subr.mxu0 0.0
    %238 = vmatpush1.msra.mxu0 0.0
    %239 = vmatprep.subr.mxu0 0.0
    %240 = vmatpush1.msra.mxu0 0.0
    %241 = vmatprep.subr.mxu0 0.0
    %242 = vmatpush1.msra.mxu0 0.0
    %243 = vmatprep.subr.mxu0 0.0
    %244 = vmatpush1.msra.mxu0 0.0
    %245 = vmatprep.subr.mxu0 0.0
    %246 = vmatpush1.msra.mxu0 0.0
    %247 = vmatprep.subr.mxu0 0.0
    %248 = vmatpush1.msra.mxu0 0.0
    %249 = vmatprep.subr.mxu0 0.0
    %250 = vmatpush1.msra.mxu0 0.0
    %251 = vmatprep.subr.mxu0 0.0
    %252 = vmatpush1.msra.mxu0 0.0
    %253 = vmatprep.subr.mxu0 0.0
    %254 = vmatpush1.msra.mxu0 0.0
    %255 = vmatprep.subr.mxu0 0.0
    %256 = vmatpush1.msra.mxu0 0.0
    %257 = vmatprep.subr.mxu0 0.0
    %258 = vmatpush1.msra.mxu0 0.0
    %259 = vmatprep.subr.mxu0 0.0
    %260 = vmatpush1.msra.mxu0 0.0
    %261 = vmatprep.subr.mxu0 0.0
    %262 = vmatpush1.msra.mxu0 0.0
    %263 = vmatprep.subr.mxu0 0.0
    %264 = vmatpush1.msra.mxu0 0.0
    %265 = vmatprep.subr.mxu0 0.0
    %266 = vmatpush1.msra.mxu0 0.0
    %267 = vmatprep.subr.mxu0 0.0
    %268 = vmatpush1.msra.mxu0 0.0
    %269 = vmatprep.subr.mxu0 0.0
    %270 = vmatpush1.msra.mxu0 0.0
    %271 = vmatprep.subr.mxu0 0.0
    %272 = vmatpush1.msra.mxu0 0.0
    %273 = vmatprep.subr.mxu0 0.0
    %274 = vmatpush1.msra.mxu0 0.0
    %275 = vmatprep.subr.mxu0 0.0
    %276 = vmatpush1.msra.mxu0 0.0
    %277 = vmatprep.subr.mxu0 0.0
    %278 = vmatpush1.msra.mxu0 0.0
    %279 = vmatprep.subr.mxu0 0.0
    %280 = vmatpush1.msra.mxu0 0.0
    %281 = vmatprep.subr.mxu0 0.0
    %282 = vmatpush1.msra.mxu0 0.0
    %283 = vmatprep.subr.mxu0 0.0
    %284 = vmatpush1.msra.mxu0 0.0
    %285 = vmatprep.mubr.f32.mxu0 0.0
    %286 = vmatmul.mubr.f32.gmra.mrb[0].mxu0 %v216
    %v287 = vpop.f32.mrb[0].mxu0
    %v288 = vadd.f32 0.0, %v287
    %v289 = vpop.f32.mrb[0].mxu0
    %290 = vdwg.mxu0
    %291 = vrot.lane.b32.xlu0 %v117, 112
    %v292 = vpop.permute.xlu0 %291
    %293 = vrot.lane.b32.xlu0 %v126, 112
    %v294 = vpop.permute.xlu0 %293
    %v295 = vsel %vm127, %v292, 0
    %v297 = vsel %vm127, %v294, 0
    %299 = vmatprep.subr.mxu0 0.0
    %300 = vmatpush1.xpose.msra.mxu0 %v297
    %301 = vmatprep.subr.mxu0 0.0
    %302 = vmatpush1.xpose.msra.mxu0 0.0
    %303 = vmatprep.subr.mxu0 0.0
    %304 = vmatpush1.xpose.msra.mxu0 0.0
    %305 = vmatprep.subr.mxu0 0.0
    %306 = vmatpush1.xpose.msra.mxu0 0.0
    %307 = vmatprep.subr.mxu0 0.0
    %308 = vmatpush1.xpose.msra.mxu0 0.0
    %309 = vmatprep.subr.mxu0 0.0
    %310 = vmatpush1.xpose.msra.mxu0 0.0
    %311 = vmatprep.subr.mxu0 0.0
    %312 = vmatpush1.xpose.msra.mxu0 0.0
    %313 = vmatprep.subr.mxu0 0.0
    %314 = vmatpush1.xpose.msra.mxu0 0.0
    %315 = vmatprep.subr.mxu0 0.0
    %316 = vmatpush1.xpose.msra.mxu0 0.0
    %317 = vmatprep.subr.mxu0 0.0
    %318 = vmatpush1.xpose.msra.mxu0 0.0
    %319 = vmatprep.subr.mxu0 0.0
    %320 = vmatpush1.xpose.msra.mxu0 0.0
    %321 = vmatprep.subr.mxu0 0.0
    %322 = vmatpush1.xpose.msra.mxu0 0.0
    %323 = vmatprep.subr.mxu0 0.0
    %324 = vmatpush1.xpose.msra.mxu0 0.0
    %325 = vmatprep.subr.mxu0 0.0
    %326 = vmatpush1.xpose.msra.mxu0 0.0
    %327 = vmatprep.subr.mxu0 0.0
    %328 = vmatpush1.xpose.msra.mxu0 0.0
    %329 = vmatprep.subr.mxu0 0.0
    %330 = vmatpush1.xpose.msra.mxu0 0.0
    %331 = vmatprep.subr.mxu0 0.0
    %332 = vmatpush1.xpose.msra.mxu0 0.0
    %333 = vmatprep.subr.mxu0 0.0
    %334 = vmatpush1.xpose.msra.mxu0 0.0
    %335 = vmatprep.subr.mxu0 0.0
    %336 = vmatpush1.xpose.msra.mxu0 0.0
    %337 = vmatprep.subr.mxu0 0.0
    %338 = vmatpush1.xpose.msra.mxu0 0.0
    %339 = vmatprep.subr.mxu0 0.0
    %340 = vmatpush1.xpose.msra.mxu0 0.0
    %341 = vmatprep.subr.mxu0 0.0
    %342 = vmatpush1.xpose.msra.mxu0 0.0
    %343 = vmatprep.subr.mxu0 0.0
    %344 = vmatpush1.xpose.msra.mxu0 0.0
    %345 = vmatprep.subr.mxu0 0.0
    %346 = vmatpush1.xpose.msra.mxu0 0.0
    %347 = vmatprep.subr.mxu0 0.0
    %348 = vmatpush1.xpose.msra.mxu0 0.0
    %349 = vmatprep.subr.mxu0 0.0
    %350 = vmatpush1.xpose.msra.mxu0 0.0
    %351 = vmatprep.subr.mxu0 0.0
    %352 = vmatpush1.xpose.msra.mxu0 0.0
    %353 = vmatprep.subr.mxu0 0.0
    %354 = vmatpush1.xpose.msra.mxu0 0.0
    %355 = vmatprep.subr.mxu0 0.0
    %356 = vmatpush1.xpose.msra.mxu0 0.0
    %357 = vmatprep.subr.mxu0 0.0
    %358 = vmatpush1.xpose.msra.mxu0 0.0
    %359 = vmatprep.subr.mxu0 0.0
    %360 = vmatpush1.xpose.msra.mxu0 0.0
    %361 = vmatprep.subr.mxu0 0.0
    %362 = vmatpush1.xpose.msra.mxu0 0.0
    %363 = vmatprep.mubr.f32.mxu0 0.0
    %364 = vmatmul.mubr.f32.gmra.mrb[0].mxu0 %v295
    %v365 = vpop.f32.mrb[0].mxu0
    %v366 = vadd.f32 0.0, %v365
    %v367 = vpop.f32.mrb[0].mxu0
    %368 = vdwg.mxu0
    %v369 = vsel %vm202, %v366, -inf
    %370 = vmax.xlane.f32.xlu0 %v369
    %v371 = vpop.xlane.xlu0 %370
    %v372 = vsub.f32 %v366, %v371
    %v373 = vmul.f32 %v372, 1.442695
    %v374 = vpow.pop %v373
    %v375 = vsel %vm202, %v374, 0.0
    %376 = vadd.xlane.f32.xlu0 %v375
    %v377 = vpop.xlane.xlu0 %376
    %v378 = vrcp.pop %v377
    %v379 = vmul.f32 %v374, %v378
    %s380 = scalar_lea.vmem [#allocation4], 4
    %381 = vst.msk [vmem:[%s380] sm:$0xf] %vm202, %v379
    %382 = vrot.lane.b32.xlu0 %v122, 112
    %v383 = vpop.permute.xlu0 %382
    %v385 = vsel %vm39, %v379, 0
    %v387 = vsel %vm46, %v383, 0
    %389 = vmatprep.subr.mxu0 0.0
    %390 = vmatpush1.msra.mxu0 %v387
    %391 = vmatprep.subr.mxu0 0.0
    %392 = vmatpush1.msra.mxu0 0.0
    %393 = vmatprep.subr.mxu0 0.0
    %394 = vmatpush1.msra.mxu0 0.0
    %395 = vmatprep.subr.mxu0 0.0
    %396 = vmatpush1.msra.mxu0 0.0
    %397 = vmatprep.subr.mxu0 0.0
    %398 = vmatpush1.msra.mxu0 0.0
    %399 = vmatprep.subr.mxu0 0.0
    %400 = vmatpush1.msra.mxu0 0.0
    %401 = vmatprep.subr.mxu0 0.0
    %402 = vmatpush1.msra.mxu0 0.0
    %403 = vmatprep.subr.mxu0 0.0
    %404 = vmatpush1.msra.mxu0 0.0
    %405 = vmatprep.subr.mxu0 0.0
    %406 = vmatpush1.msra.mxu0 0.0
    %407 = vmatprep.subr.mxu0 0.0
    %408 = vmatpush1.msra.mxu0 0.0
    %409 = vmatprep.subr.mxu0 0.0
    %410 = vmatpush1.msra.mxu0 0.0
    %411 = vmatprep.subr.mxu0 0.0
    %412 = vmatpush1.msra.mxu0 0.0
    %413 = vmatprep.subr.mxu0 0.0
    %414 = vmatpush1.msra.mxu0 0.0
    %415 = vmatprep.subr.mxu0 0.0
    %416 = vmatpush1.msra.mxu0 0.0
    %417 = vmatprep.subr.mxu0 0.0
    %418 = vmatpush1.msra.mxu0 0.0
    %419 = vmatprep.subr.mxu0 0.0
    %420 = vmatpush1.msra.mxu0 0.0
    %421 = vmatprep.subr.mxu0 0.0
    %422 = vmatpush1.msra.mxu0 0.0
    %423 = vmatprep.subr.mxu0 0.0
    %424 = vmatpush1.msra.mxu0 0.0
    %425 = vmatprep.subr.mxu0 0.0
    %426 = vmatpush1.msra.mxu0 0.0
    %427 = vmatprep.subr.mxu0 0.0
    %428 = vmatpush1.msra.mxu0 0.0
    %429 = vmatprep.subr.mxu0 0.0
    %430 = vmatpush1.msra.mxu0 0.0
    %431 = vmatprep.subr.mxu0 0.0
    %432 = vmatpush1.msra.mxu0 0.0
    %433 = vmatprep.subr.mxu0 0.0
    %434 = vmatpush1.msra.mxu0 0.0
    %435 = vmatprep.subr.mxu0 0.0
    %436 = vmatpush1.msra.mxu0 0.0
    %437 = vmatprep.subr.mxu0 0.0
    %438 = vmatpush1.msra.mxu0 0.0
    %439 = vmatprep.subr.mxu0 0.0
    %440 = vmatpush1.msra.mxu0 0.0
    %441 = vmatprep.subr.mxu0 0.0
    %442 = vmatpush1.msra.mxu0 0.0
    %443 = vmatprep.subr.mxu0 0.0
    %444 = vmatpush1.msra.mxu0 0.0
    %445 = vmatprep.subr.mxu0 0.0
    %446 = vmatpush1.msra.mxu0 0.0
    %447 = vmatprep.subr.mxu0 0.0
    %448 = vmatpush1.msra.mxu0 0.0
    %449 = vmatprep.subr.mxu0 0.0
    %450 = vmatpush1.msra.mxu0 0.0
    %451 = vmatprep.subr.mxu0 0.0
    %452 = vmatpush1.msra.mxu0 0.0
    %453 = vmatprep.mubr.f32.mxu0 0.0
    %454 = vmatmul.mubr.f32.gmra.mrb[0].mxu0 %v385
    %v455 = vpop.f32.mrb[0].mxu0
    %v456 = vadd.f32 0.0, %v455
    %v457 = vpop.f32.mrb[0].mxu0
    %458 = vdwg.mxu0
    %460 = vrot.lane.b32.xlu0 %v456, 16
    %v461 = vpop.permute.xlu0 %460
    %v463 = vsel %vm127, %v288, %v461
    %v464 = vld [vmem:[%s3] sm:$0xf]
    %v465 = vld [vmem:[%s4] sm:$0xf]
    %467 = vset.pattern.permute.xlu0 0
    %468 = vperm.xlu0 %467, %v465
    %v469 = vpop.permute.xlu0 %468
    %v472 = vsel %vm39, %v464, 0
    %v475 = vsel %vm46, %v463, 0
    %477 = vmatprep.subr.mxu0 0.0
    %478 = vmatpush1.msra.mxu0 %v475
    %479 = vmatprep.subr.mxu0 0.0
    %480 = vmatpush1.msra.mxu0 0.0
    %481 = vmatprep.subr.mxu0 0.0
    %482 = vmatpush1.msra.mxu0 0.0
    %483 = vmatprep.subr.mxu0 0.0
    %484 = vmatpush1.msra.mxu0 0.0
    %485 = vmatprep.subr.mxu0 0.0
    %486 = vmatpush1.msra.mxu0 0.0
    %487 = vmatprep.subr.mxu0 0.0
    %488 = vmatpush1.msra.mxu0 0.0
    %489 = vmatprep.subr.mxu0 0.0
    %490 = vmatpush1.msra.mxu0 0.0
    %491 = vmatprep.subr.mxu0 0.0
    %492 = vmatpush1.msra.mxu0 0.0
    %493 = vmatprep.subr.mxu0 0.0
    %494 = vmatpush1.msra.mxu0 0.0
    %495 = vmatprep.subr.mxu0 0.0
    %496 = vmatpush1.msra.mxu0 0.0
    %497 = vmatprep.subr.mxu0 0.0
    %498 = vmatpush1.msra.mxu0 0.0
    %499 = vmatprep.subr.mxu0 0.0
    %500 = vmatpush1.msra.mxu0 0.0
    %501 = vmatprep.subr.mxu0 0.0
    %502 = vmatpush1.msra.mxu0 0.0
    %503 = vmatprep.subr.mxu0 0.0
    %504 = vmatpush1.msra.mxu0 0.0
    %505 = vmatprep.subr.mxu0 0.0
    %506 = vmatpush1.msra.mxu0 0.0
    %507 = vmatprep.subr.mxu0 0.0
    %508 = vmatpush1.msra.mxu0 0.0
    %509 = vmatprep.subr.mxu0 0.0
    %510 = vmatpush1.msra.mxu0 0.0
    %511 = vmatprep.subr.mxu0 0.0
    %512 = vmatpush1.msra.mxu0 0.0
    %513 = vmatprep.subr.mxu0 0.0
    %514 = vmatpush1.msra.mxu0 0.0
    %515 = vmatprep.subr.mxu0 0.0
    %516 = vmatpush1.msra.mxu0 0.0
    %517 = vmatprep.subr.mxu0 0.0
    %518 = vmatpush1.msra.mxu0 0.0
    %519 = vmatprep.subr.mxu0 0.0
    %520 = vmatpush1.msra.mxu0 0.0
    %521 = vmatprep.subr.mxu0 0.0
    %522 = vmatpush1.msra.mxu0 0.0
    %523 = vmatprep.subr.mxu0 0.0
    %524 = vmatpush1.msra.mxu0 0.0
    %525 = vmatprep.subr.mxu0 0.0
    %526 = vmatpush1.msra.mxu0 0.0
    %527 = vmatprep.subr.mxu0 0.0
    %528 = vmatpush1.msra.mxu0 0.0
    %529 = vmatprep.subr.mxu0 0.0
    %530 = vmatpush1.msra.mxu0 0.0
    %531 = vmatprep.subr.mxu0 0.0
    %532 = vmatpush1.msra.mxu0 0.0
    %533 = vmatprep.subr.mxu0 0.0
    %534 = vmatpush1.msra.mxu0 0.0
    %535 = vmatprep.subr.mxu0 0.0
    %536 = vmatpush1.msra.mxu0 0.0
    %537 = vmatprep.subr.mxu0 0.0
    %538 = vmatpush1.msra.mxu0 0.0
    %539 = vmatprep.subr.mxu0 0.0
    %540 = vmatpush1.msra.mxu0 0.0
    %541 = vmatprep.mubr.f32.mxu0 0.0
    %542 = vmatmul.mubr.f32.gmra.mrb[0].mxu0 %v472
    %v543 = vpop.f32.mrb[0].mxu0
    %v544 = vadd.f32 %v469, %v543
    %v545 = vpop.f32.mrb[0].mxu0
    %546 = vdwg.mxu0
    %vm547 = vcmask 257024
    %548 = vst.msk [vmem:[#allocation2] sm:$0xf] %vm547, %v544
    // Predicated region
    $region22: #{tpu_custom_call.1} parent=1 // pred_check
      _
    $region23: #{tpu_custom_call.1} parent=1 // pred_check_branch
      %550 = sbr.rel (0) target = $region25
    $region24: #{tpu_custom_call.1} parent=1 // pred_region
      %s552 = ssub.s32 64, 64
      %553 = vsyncadd [#allocation3], %s552
      %s555 = sshll.u32 [#allocation2], 4
      %s556 = int_to_ptr.vmem [resolvable:$true] %s555
      %558 = dma.vmem_to_hbm [thread:$0]  %s556, 64, %s5, [#allocation3]
    $region25: #{tpu_custom_call.1} parent=1 // pred_fallthru
      _
    // Predicated region
    $region26: #{tpu_custom_call.1} parent=1 // pred_check
      _
    $region27: #{tpu_custom_call.1} parent=1 // pred_check_branch
      %560 = sbr.rel (0) target = $region29
    $region28: #{tpu_custom_call.1} parent=1 // pred_region
      %s562 = ssub.s32 128, 128
      %563 = vsyncadd [#allocation5], %s562
      %s564 = sshll.u32 [#allocation4], 4
      %s565 = int_to_ptr.vmem [resolvable:$true] %s564
      %570 = dma.vmem_to_hbm [thread:$0]  %s565, 128, %s6, [#allocation5], 64, 64, 4
    $region29: #{tpu_custom_call.1} parent=1 // pred_fallthru
      _
    // Predicated region
    $region30: #{tpu_custom_call.1} parent=1 // pred_check
      _
    $region31: #{tpu_custom_call.1} parent=1 // pred_check_branch
      %572 = sbr.rel (0) target = $region33
    $region32: #{tpu_custom_call.1} parent=1 // pred_region
      %573 = dma.done [#allocation3], 64
    $region33: #{tpu_custom_call.1} parent=1 // pred_fallthru
      _
    // Predicated region
    $region34: #{tpu_custom_call.1} parent=1 // pred_check
      _
    $region35: #{tpu_custom_call.1} parent=1 // pred_check_branch
      %575 = sbr.rel (0) target = $region37
    $region36: #{tpu_custom_call.1} parent=1 // pred_region
      %576 = dma.done [#allocation5], 128
    $region37: #{tpu_custom_call.1} parent=1 // pred_fallthru
      _
    %577 = vsyncpa [#allocation3], 1
    %578 = vsyncpa [#allocation5], 1

</llo_original>
